<compile_context>
chip_gen: v7x
topology: tpu7x:2x2x1
jax: 0.10.0
libtpu: 0.0.40
codegen_flags: <defaults>
</compile_context>

<pallas_src>
import functools

import jax
import jax.numpy as jnp
from jax.experimental import pallas as pl
from jax.experimental.pallas import tpu as pltpu


def _round_up(x, m):
    return -(-x // m) * m


def _choose_row_tile(num_rows, per_row_bytes, fixed_bytes=0):
    """How many input image rows (W pixels each) one grid step processes."""
    budget = (12 << 20) - fixed_bytes        # conservative: fits v7x's 64 MiB VMEM with headroom
    vmem_cap = max(8, (budget // max(per_row_bytes, 1)) // 8 * 8)
    cap = min(vmem_cap, 512)                 # ~512-row-class blocks reach ~85% of HBM roofline
    if num_rows <= 8:
        return num_rows
    cap = min(cap, _round_up(num_rows, 8))
    divs = [d for d in range(8, min(cap, num_rows) + 1, 8) if num_rows % d == 0]
    even = [d for d in divs if (num_rows // d) % 2 == 0]   # balanced over v7x's 2 TensorCores
    if even:
        return max(even)
    if divs:
        return max(divs)
    return cap                               # caller zero-pads the row axis up to a multiple


# --------------------------------------------------------------------------- #
# Kernels
# --------------------------------------------------------------------------- #
def _upconv_dense_kernel(x_ref, w_ref, o_ref):
    # x_ref: (tr, W*Cin)   lane-dense input rows
    # w_ref: (W*Cin, 4*W*Cout)  block-diagonal embedded ConvTranspose weights
    # o_ref: (tr, 4*W*Cout)     final (ki, j, kj, co)-ordered columns
    y = jnp.dot(x_ref[...], w_ref[...], preferred_element_type=jnp.float32)
    y = jnp.maximum(y, 0.1 * y)              # fused LeakyReLU(0.1): single vmax
    o_ref[...] = y.astype(o_ref.dtype)       # one wide unmasked store


def _upconv_block_kernel(x_ref, w0_ref, w1_ref, o_ref, *, rows, width):
    # x_ref : (tr, W, Cin);  w0/w1: (Cin, 2*Cout) with columns (kj, co)
    # o_ref : (tr, 2, W, 2*Cout)  -- lane-dense when 2*Cout >= 128 (this path's target)
    cin = x_ref.shape[-1]
    cols = w0_ref.shape[-1]
    x2d = x_ref[...].reshape(rows * width, cin)
    y0 = jnp.dot(x2d, w0_ref[...], preferred_element_type=jnp.float32)
    y1 = jnp.dot(x2d, w1_ref[...], preferred_element_type=jnp.float32)
    y0 = jnp.maximum(y0, 0.1 * y0)
    y1 = jnp.maximum(y1, 0.1 * y1)
    o_ref[:, 0:1, :, :] = y0.reshape(rows, 1, width, cols).astype(o_ref.dtype)
    o_ref[:, 1:2, :, :] = y1.reshape(rows, 1, width, cols).astype(o_ref.dtype)


# --------------------------------------------------------------------------- #
# Wrappers
# --------------------------------------------------------------------------- #
def upconv_forward_nhwc(x_nhwc, weight):
    """Core path. x_nhwc: (N, H, W, Cin); weight: (Cin, Cout, 2, 2) (PyTorch layout).

    Returns (N, 2H, 2W, Cout). Only free (contiguous) reshapes around the kernel.
    """
    N, H, W, Cin = x_nhwc.shape
    Cin_w, Cout, KH, KW = weight.shape
    assert Cin == Cin_w and KH == 2 and KW == 2

    dtype = x_nhwc.dtype
    itemsize = jnp.dtype(dtype).itemsize
    R = N * H
    cout2 = 2 * Cout
    n_cols = 2 * W * cout2                      # = 4*W*Cout

    # w_perm[ci, ki, kj, co] = weight[ci, co, ki, kj]
    w_perm = jnp.transpose(weight, (0, 2, 3, 1)).astype(dtype)

    flops = 8 * R * W * Cin * Cout
    in_bytes = R * W * Cin * itemsize
    out_bytes = R * n_cols * itemsize

    dense_w_bytes = (W * Cin) * n_cols * itemsize
    use_dense = dense_w_bytes <= (2 << 20) and (Cin < 128 or cout2 < 128)

    if use_dense:
        # ---- Path A: block-diagonal embedded weight, one matmul per step. ----
        # w_big[j*Cin+ci, ki*(2*W*Cout) + j*(2*Cout) + kj*Cout + co] = weight[ci,co,ki,kj]
        eye = jnp.eye(W, dtype=dtype)
        w_big = jnp.einsum('jp,cklo->jckplo', eye, w_perm).reshape(W * Cin, n_cols)

        per_row = 2 * (_round_up(W * Cin, 128) + _round_up(n_cols, 128)) * itemsize
        tr = _choose_row_tile(R, per_row, fixed_bytes=2 * dense_w_bytes)
        R_pad = _round_up(R, tr)

        x_rows = x_nhwc.reshape(R, W * Cin)               # free reshape, lane-dense input
        if R_pad != R:
            x_rows = jnp.pad(x_rows, ((0, R_pad - R), (0, 0)))

        out_rows = pl.pallas_call(
            _upconv_dense_kernel,
            out_shape=jax.ShapeDtypeStruct((R_pad, n_cols), dtype),
            grid_spec=pltpu.PrefetchScalarGridSpec(
                num_scalar_prefetch=0,
                grid=(R_pad // tr,),
                in_specs=[
                    pl.BlockSpec((tr, W * Cin), lambda i: (i, 0)),
                    pl.BlockSpec((W * Cin, n_cols), lambda i: (0, 0)),
                ],
                out_specs=pl.BlockSpec((tr, n_cols), lambda i: (i, 0)),
            ),
            compiler_params=pltpu.CompilerParams(
                dimension_semantics=("parallel",),
                vmem_limit_bytes=32 * 1024 * 1024,
            ),
            cost_estimate=pl.CostEstimate(
                flops=flops, transcendentals=0,
                bytes_accessed=in_bytes + out_bytes + dense_w_bytes),
        )(x_rows, w_big)

        if R_pad != R:
            out_rows = out_rows[:R]
        # (R, 4*W*Cout) is already (n, i, ki, j, kj, co) row-major -> free reshape.
        return out_rows.reshape(N, 2 * H, 2 * W, Cout)

    # ---- Path B: production channel counts (2*Cout >= 128 preferred). ----
    w0 = w_perm[:, 0].reshape(Cin, cout2)                 # columns ordered (kj, co)
    w1 = w_perm[:, 1].reshape(Cin, cout2)
    w_bytes = 2 * Cin * cout2 * itemsize

    per_row = 2 * (_round_up(W, 8) * _round_up(Cin, 128)
                   + 2 * _round_up(W, 8) * _round_up(cout2, 128)) * itemsize
    per_row += 2 * W * _round_up(cout2, 128) * 4          # f32 y0/y1 temporaries
    tr = _choose_row_tile(R, per_row, fixed_bytes=2 * w_bytes)
    R_pad = _round_up(R, tr)

    x3d = x_nhwc.reshape(R, W, Cin)
    if R_pad != R:
        x3d = jnp.pad(x3d, ((0, R_pad - R), (0, 0), (0, 0)))

    kernel = functools.partial(_upconv_block_kernel, rows=tr, width=W)
    out4 = pl.pallas_call(
        kernel,
        out_shape=jax.ShapeDtypeStruct((R_pad, 2, W, cout2), dtype),
        grid_spec=pltpu.PrefetchScalarGridSpec(
            num_scalar_prefetch=0,
            grid=(R_pad // tr,),
            in_specs=[
                pl.BlockSpec((tr, W, Cin), lambda i: (i, 0, 0)),
                pl.BlockSpec((Cin, cout2), lambda i: (0, 0)),
                pl.BlockSpec((Cin, cout2), lambda i: (0, 0)),
            ],
            out_specs=pl.BlockSpec((tr, 2, W, cout2), lambda i: (i, 0, 0, 0)),
        ),
        compiler_params=pltpu.CompilerParams(
            dimension_semantics=("parallel",),
            vmem_limit_bytes=32 * 1024 * 1024,
        ),
        cost_estimate=pl.CostEstimate(
            flops=flops, transcendentals=0,
            bytes_accessed=in_bytes + out_bytes + w_bytes),
    )(x3d, w0, w1)

    if R_pad != R:
        out4 = out4[:R]
    # (R, 2, W, 2*Cout) is already (n, i, ki, j, kj, co) row-major -> free reshape.
    return out4.reshape(N, 2 * H, 2 * W, Cout)


def upconv_forward(x_nchw, weight):
    """PyTorch-layout entry point: NCHW in, NCHW out (matches nn.ConvTranspose2d)."""
    # TODO(synk): prefer upconv_forward_nhwc inside a fused NHWC pipeline — these two
    # boundary transposes are plain-XLA HBM passes an NHWC producer/consumer avoids.
    x_nhwc = jnp.transpose(x_nchw, (0, 2, 3, 1))
    out_nhwc = upconv_forward_nhwc(x_nhwc, weight)
    return jnp.transpose(out_nhwc, (0, 3, 1, 2))


def upconv_reference(x_nchw, weight):
    """Pure-JAX reference for ConvTranspose2d(k=2, s=2, bias=False) + LeakyReLU(0.1)."""
    N, Cin, H, W = x_nchw.shape
    _, Cout, KH, KW = weight.shape
    y = jnp.einsum('nchw,cokl->nohkwl', x_nchw, weight,
                   precision=jax.lax.Precision.HIGHEST)   # (N, Cout, H, 2, W, 2)
    y = y.reshape(N, Cout, H * KH, W * KW)
    return jnp.where(y >= 0, y, 0.1 * y)


if __name__ == "__main__":
    key = jax.random.PRNGKey(0)
    kx, kw = jax.random.split(key)

    N, Cin, Cout, H, W = 2, 4, 8, 16, 16
    x = jax.random.normal(kx, (N, Cin, H, W), dtype=jnp.float32)
    # PyTorch ConvTranspose2d weight shape: (in_channels, out_channels, kH, kW)
    weight = jax.random.normal(kw, (Cin, Cout, 2, 2), dtype=jnp.float32) * 0.1

    out = upconv_forward(x, weight)
    out = jax.block_until_ready(out)

    ref = upconv_reference(x, weight)
    assert out.shape == (N, Cout, 2 * H, 2 * W), out.shape
    # Tolerance covers MXU f32-pass rounding differences vs the XLA reference;
    # any layout/semantics bug would produce O(1) errors, not 1e-3.
    assert jnp.allclose(out, ref, atol=1e-3, rtol=1e-3), "mismatch vs reference"

    print("KERNEL_OK")
</pallas_src>

<mosaic_0001>
module attributes {stable_mosaic.version = 11 : i64} {
  func.func @_upconv_dense_kernel(%arg0: i32, %arg1: memref<16x64xf32, #tpu.memory_space<vmem>>, %arg2: memref<64x512xf32, #tpu.memory_space<vmem>>, %arg3: memref<16x512xf32, #tpu.memory_space<vmem>>) attributes {dimension_semantics = [#tpu.dimension_semantics<parallel>], iteration_bounds = array<i64: 2>, scalar_prefetch = 0 : i64, scratch_operands = 0 : i64, tpu.core_type = #tpu.core_type<tc>, window_params = [{transform_indices = @transform_0, window_bounds = array<i64: 16, 64>}, {pipeline_mode = #tpu.pipeline_mode<synchronous>, transform_indices = @transform_1, window_bounds = array<i64: 64, 512>}, {transform_indices = @transform_2, window_bounds = array<i64: 16, 512>}]} {
    %c0 = arith.constant 0 : index
    %c0_0 = arith.constant 0 : index
    %0 = vector.load %arg1[%c0, %c0_0] : memref<16x64xf32, #tpu.memory_space<vmem>>, vector<16x64xf32>
    %c0_1 = arith.constant 0 : index
    %c0_2 = arith.constant 0 : index
    %1 = vector.load %arg2[%c0_1, %c0_2] : memref<64x512xf32, #tpu.memory_space<vmem>>, vector<64x512xf32>
    %cst = arith.constant dense<0.000000e+00> : vector<16x512xf32>
    %2 = tpu.matmul %0, %1, %cst {dimension_numbers = #tpu.dot_dimension_numbers<[1], [0], [0], [1], [0, 0, 1, 1], [], []>} : vector<16x64xf32>, vector<64x512xf32>, vector<16x512xf32> -> vector<16x512xf32>
    %cst_3 = arith.constant 1.000000e-01 : f32
    %3 = vector.broadcast %cst_3 : f32 to vector<16x512xf32>
    %4 = arith.mulf %3, %2 : vector<16x512xf32>
    %5 = arith.maximumf %2, %4 : vector<16x512xf32>
    %c0_4 = arith.constant 0 : index
    %c0_5 = arith.constant 0 : index
    %6 = vector.load %arg3[%c0_4, %c0_5] : memref<16x512xf32, #tpu.memory_space<vmem>>, vector<16x512xf32>
    tpu.vector_store %arg3[%c0_4, %c0_5], %5 {strides = array<i32>} : memref<16x512xf32, #tpu.memory_space<vmem>>, vector<16x512xf32>,
    return
  }
  func.func @transform_0(%arg0: i32) -> (i32, i32) {
    %c0_i32 = arith.constant 0 : i32
    %c0_i32_0 = arith.constant 0 : i32
    return %arg0, %c0_i32 : i32, i32
  }
  func.func @transform_1(%arg0: i32) -> (i32, i32) {
    %c0_i32 = arith.constant 0 : i32
    %c0_i32_0 = arith.constant 0 : i32
    %c0_i32_1 = arith.constant 0 : i32
    return %c0_i32, %c0_i32_0 : i32, i32
  }
  func.func @transform_2(%arg0: i32) -> (i32, i32) {
    %c0_i32 = arith.constant 0 : i32
    %c0_i32_0 = arith.constant 0 : i32
    return %arg0, %c0_i32 : i32, i32
  }
}

</mosaic_0001>

<llo_original>
// kernel: tpu_custom_call.1
$region0: #{tpu_custom_call.1}
  #allocation0 [shape = 'u32[]', space=smem, size = 0x4, offset = 0x4, fixed_abs, tag = 'smem constant byte address 0x4 - core index']
  #allocation1 [shape = 'u32[144,128]{1,0:T(1,128)}', space=vmem, size = 0x12000, scoped, tag = 'internal scratch']
  %s0 = inlined_call_operand.hbm [shape: f32[32,64], index: 0, kind: input, shape index: {}]
  %s1 = inlined_call_operand.hbm [shape: f32[64,512], index: 1, kind: input, shape index: {}]
  %s2 = inlined_call_operand.hbm [shape: f32[32,512], index: 2, kind: output, shape index: {}]
  %s3 = sld [smem:[#allocation0]]
  $region49: #{tpu_custom_call.1} parent=0
    _
  %s5 = ssub.s32 1, %s3
  %s6 = scalar_select 0, %s5, %s3
  $region1: #{tpu_custom_call.1} parent=0
    #allocation2 [shape = 'u8[16384]{0}', space=vmem, size = 0x4000, scoped, tag = 'input window, operand 0']
    #allocation3 [shape = 's32[2]{0}', space=sflag, size = 0x8, scoped, tag = 'scoped memory for tpu_custom_call.1']
    #allocation4 [shape = 's32[2]{0}', space=sflag, size = 0x8, scoped, tag = 'scoped memory for tpu_custom_call.1']
    #allocation5 [shape = 'u8[131072]{0}', space=vmem, size = 0x20000, scoped, tag = 'input window, operand 1, single buffered']
    #allocation6 [shape = 's32[1]{0}', space=sflag, size = 0x4, scoped, tag = 'scoped memory for tpu_custom_call.1']
    #allocation7 [shape = 'u8[65536]{0}', space=vmem, size = 0x10000, scoped, tag = 'output window, operand 0']
    %7 = vsyncpa [#allocation3], 0
    %s8 = scalar_lea.sflag [#allocation3], 1
    %9 = vsyncpa %s8, 0
    %10 = vsyncpa [#allocation6], 0
    %11 = vsyncpa [#allocation4], 0
    %s12 = scalar_lea.sflag [#allocation4], 1
    %13 = vsyncpa %s12, 0
    loop: start=0, step=1, limit=4
    $region2: #{tpu_custom_call.1} parent=1 // loop_pre_header
      _
    $region3: #{tpu_custom_call.1} parent=1 // loop_header
      %s15 = sphi 0, %s19
      %p16 = scmp.ge.s32.totalorder %s15, 4
      %s25 = sphi 0, %s27
      %s28 = sphi 0, %s25
      %s29 = sphi 0, %s28
      %s45 = sphi 0, %s29
      %s49 = sphi 0, %s49
      %s51 = sphi 0, %s49
      %s52 = sphi 0, %s51
      %s66 = sphi 0, %s52
      %s72 = sphi 0, %s74
      %s75 = sphi 0, %s72
      %s76 = sphi 0, %s75
      %s92 = sphi 0, %s76
    $region4: #{tpu_custom_call.1} parent=1 // loop_header_branch
      %18 = sbr.rel (%p16) target = $region8
    $region5: #{tpu_custom_call.1} parent=1 // loop_body
      %s20 = ssub.s32 %s15, 1
      %s21 = ssub.s32 %s15, 2
      %s22 = sadd.s32 %s15, 1
      %s23 = ssub.s32 %s15, %s22
      %p24 = scmp.eq.s32.totalorder %s23, 0
      %s26 = sadd.s32 %s25, 1
      %s27 = scalar_select %p24, %s25, %s26
      %p30 = pneg %p24
      %p31 = scmp.eq.s32.totalorder %s15, 1
      %p32 = por %p30, %p31
      %p33 = scmp.ne.s32.totalorder %s25, %s28
      %p34 = scmp.eq.s32.totalorder %s15, 0
      %p35 = por %p33, %p34
      %p36 = scmp.ne.s32.totalorder %s25, %s28
      %p37 = scmp.eq.s32.totalorder %s20, 1
      %p38 = por %p36, %p37
      %p39 = scmp.ne.s32.totalorder %s28, %s29
      %p40 = scmp.eq.s32.totalorder %s20, 0
      %p41 = por %p39, %p40
      %p42 = scmp.ne.s32.totalorder %s28, %s29
      %p43 = scmp.eq.s32.totalorder %s21, 1
      %p44 = por %p42, %p43
      %p46 = scmp.ne.s32.totalorder %s29, %s45
      %p47 = scmp.eq.s32.totalorder %s21, 0
      %p48 = por %p46, %p47
      %s50 = sadd.s32 %s49, 1
      %p53 = scmp.eq.s32.totalorder %s15, 1
      %p54 = scmp.ne.s32.totalorder %s49, %s51
      %p55 = scmp.eq.s32.totalorder %s15, 0
      %p56 = por %p54, %p55
      %p57 = scmp.ne.s32.totalorder %s49, %s51
      %p58 = scmp.eq.s32.totalorder %s20, 1
      %p59 = por %p57, %p58
      %p60 = scmp.ne.s32.totalorder %s51, %s52
      %p61 = scmp.eq.s32.totalorder %s20, 0
      %p62 = por %p60, %p61
      %p63 = scmp.ne.s32.totalorder %s51, %s52
      %p64 = scmp.eq.s32.totalorder %s21, 1
      %p65 = por %p63, %p64
      %p67 = scmp.ne.s32.totalorder %s52, %s66
      %p68 = scmp.eq.s32.totalorder %s21, 0
      %p69 = por %p67, %p68
      %s70 = ssub.s32 %s15, %s22
      %p71 = scmp.eq.s32.totalorder %s70, 0
      %s73 = sadd.s32 %s72, 1
      %s74 = scalar_select %p71, %s72, %s73
      %p77 = pneg %p71
      %p78 = scmp.eq.s32.totalorder %s15, 1
      %p79 = por %p77, %p78
      %p80 = scmp.ne.s32.totalorder %s72, %s75
      %p81 = scmp.eq.s32.totalorder %s15, 0
      %p82 = por %p80, %p81
      %p83 = scmp.ne.s32.totalorder %s72, %s75
      %p84 = scmp.eq.s32.totalorder %s20, 1
      %p85 = por %p83, %p84
      %p86 = scmp.ne.s32.totalorder %s75, %s76
      %p87 = scmp.eq.s32.totalorder %s20, 0
      %p88 = por %p86, %p87
      %p89 = scmp.ne.s32.totalorder %s75, %s76
      %p90 = scmp.eq.s32.totalorder %s21, 1
      %p91 = por %p89, %p90
      %p93 = scmp.ne.s32.totalorder %s76, %s92
      %p94 = scmp.eq.s32.totalorder %s21, 0
      %p95 = por %p93, %p94
      %p96 = scmp.le.s32.totalorder 1, %s15
      %p97 = scmp.lt.s32.totalorder %s15, 3
      %p98 = pnand %p96, %p97
      %p99 = pneg %p98
      // Predicated region
      $region9: #{tpu_custom_call.1} parent=5 // pred_check
        _
      $region10: #{tpu_custom_call.1} parent=5 // pred_check_branch
        %101 = sbr.rel (%p98) target = $region12
      $region11: #{tpu_custom_call.1} parent=5 // pred_region
        %s102 = ssub.s32 %s15, 1
        // Predicated region
        $region13: #{tpu_custom_call.1} parent=11 // pred_check
          %p103 = pneg %p62
        $region14: #{tpu_custom_call.1} parent=11 // pred_check_branch
          %105 = sbr.rel (%p103) target = $region16
        $region15: #{tpu_custom_call.1} parent=11 // pred_region
          %s107 = ssub.s32 4096, 4096
          %108 = vsyncadd [#allocation6], %s107
          %s109 = sshll.u32 [#allocation5], 4
          %s110 = int_to_ptr.vmem [resolvable:$true] %s109
          %115 = dma.hbm_to_vmem [thread:$0]  %s1, 4096, %s110, [#allocation6], 512, 512, 32
        $region16: #{tpu_custom_call.1} parent=11 // pred_fallthru
          _
      $region12: #{tpu_custom_call.1} parent=5 // pred_fallthru
        _
      %p116 = scmp.lt.s32.totalorder %s15, 2
      // Predicated region
      $region17: #{tpu_custom_call.1} parent=5 // pred_check
        %p117 = pneg %p116
      $region18: #{tpu_custom_call.1} parent=5 // pred_check_branch
        %119 = sbr.rel (%p117) target = $region20
      $region19: #{tpu_custom_call.1} parent=5 // pred_region
        // Predicated region
        $region21: #{tpu_custom_call.1} parent=19 // pred_check
          %p120 = pneg %p35
        $region22: #{tpu_custom_call.1} parent=19 // pred_check_branch
          %122 = sbr.rel (%p120) target = $region24
        $region23: #{tpu_custom_call.1} parent=19 // pred_region
          %s123 = sand.u32 %s25, 1
          %s124 = scalar_lea.sflag [#allocation3], %s123
          %s125 = sand.u32 %s25, 1
          %s126 = smul.addr %s125, 16
          %s127 = scalar_lea.vmem [#allocation2], %s126
          %s128 = smul.u32 2, %s15
          %s130 = ssub.s32 256, 256
          %131 = vsyncadd %s124, %s130
          %s132 = smul.addr %s128, 128
          %s133 = scalar_lea.hbm %s0, %s132
          %s134 = sshll.u32 %s127, 4
          %s135 = int_to_ptr.vmem [resolvable:$true] %s134
          %140 = dma.hbm_to_vmem [thread:$0]  %s133, 256, %s135, %s124, 128, 128, 8
        $region24: #{tpu_custom_call.1} parent=19 // pred_fallthru
          _
      $region20: #{tpu_custom_call.1} parent=5 // pred_fallthru
        _
      %p141 = scmp.le.s32.totalorder 1, %s15
      %p142 = scmp.lt.s32.totalorder %s15, 3
      %p143 = pnand %p141, %p142
      %p144 = pneg %p143
      // Predicated region
      $region25: #{tpu_custom_call.1} parent=5 // pred_check
        _
      $region26: #{tpu_custom_call.1} parent=5 // pred_check_branch
        %146 = sbr.rel (%p143) target = $region28
      $region27: #{tpu_custom_call.1} parent=5 // pred_region
        %s147 = ssub.s32 %s15, 1
        %s148 = sand.u32 %s28, 1
        %s149 = scalar_lea.sflag [#allocation3], %s148
        %s150 = sand.u32 %s28, 1
        %s151 = smul.addr %s150, 16
        %s152 = scalar_lea.vmem [#allocation2], %s151
        // Predicated region
        $region29: #{tpu_custom_call.1} parent=27 // pred_check
          %p153 = pneg %p41
        $region30: #{tpu_custom_call.1} parent=27 // pred_check_branch
          %155 = sbr.rel (%p153) target = $region32
        $region31: #{tpu_custom_call.1} parent=27 // pred_region
          %156 = dma.done %s149, 256
        $region32: #{tpu_custom_call.1} parent=27 // pred_fallthru
          _
        // Predicated region
        $region33: #{tpu_custom_call.1} parent=27 // pred_check
          %p157 = pneg %p62
        $region34: #{tpu_custom_call.1} parent=27 // pred_check_branch
          %159 = sbr.rel (%p157) target = $region36
        $region35: #{tpu_custom_call.1} parent=27 // pred_region
          %160 = dma.done [#allocation6], 4096
        $region36: #{tpu_custom_call.1} parent=27 // pred_fallthru
          _
        %s161 = sand.u32 %s28, 1
        %s162 = scalar_lea.sflag [#allocation3], %s161
        %s163 = sand.u32 %s28, 1
        %s164 = smul.addr %s163, 16
        %s165 = scalar_lea.vmem [#allocation2], %s164
        %p166 = pneg %p41
        %p167 = pneg %p38
        %p168 = pneg %p62
        %p169 = pneg %p59
        %p170 = pneg %p88
        %p171 = pneg %p85
        %s172 = sand.u32 %s75, 1
        %s173 = scalar_lea.sflag [#allocation4], %s172
        %s174 = sand.u32 %s75, 1
        %s175 = smul.addr %s174, 64
        %s176 = scalar_lea.vmem [#allocation7], %s175
        %s177 = smul.u32 2, %s20
        %s178 = smul.u32 2, %s20
        %v179 = vld [vmem:[%s152] sm:$0xff]
        %v180 = vld [vmem:[%s152 + $0x8] sm:$0xff]
        %v181 = vld [vmem:[#allocation5] sm:$0xff]
        %v182 = vld [vmem:[#allocation5 + $0x8] sm:$0xff]
        %v183 = vld [vmem:[#allocation5 + $0x10] sm:$0xff]
        %v184 = vld [vmem:[#allocation5 + $0x18] sm:$0xff]
        %v185 = vld [vmem:[#allocation5 + $0x20] sm:$0xff]
        %v186 = vld [vmem:[#allocation5 + $0x28] sm:$0xff]
        %v187 = vld [vmem:[#allocation5 + $0x30] sm:$0xff]
        %v188 = vld [vmem:[#allocation5 + $0x38] sm:$0xff]
        %v189 = vld [vmem:[#allocation5 + $0x40] sm:$0xff]
        %v190 = vld [vmem:[#allocation5 + $0x48] sm:$0xff]
        %v191 = vld [vmem:[#allocation5 + $0x50] sm:$0xff]
        %v192 = vld [vmem:[#allocation5 + $0x58] sm:$0xff]
        %v193 = vld [vmem:[#allocation5 + $0x60] sm:$0xff]
        %v194 = vld [vmem:[#allocation5 + $0x68] sm:$0xff]
        %v195 = vld [vmem:[#allocation5 + $0x70] sm:$0xff]
        %v196 = vld [vmem:[#allocation5 + $0x78] sm:$0xff]
        %v197 = vld [vmem:[#allocation5 + $0x80] sm:$0xff]
        %v198 = vld [vmem:[#allocation5 + $0x88] sm:$0xff]
        %v199 = vld [vmem:[#allocation5 + $0x90] sm:$0xff]
        %v200 = vld [vmem:[#allocation5 + $0x98] sm:$0xff]
        %v201 = vld [vmem:[#allocation5 + $0xa0] sm:$0xff]
        %v202 = vld [vmem:[#allocation5 + $0xa8] sm:$0xff]
        %v203 = vld [vmem:[#allocation5 + $0xb0] sm:$0xff]
        %v204 = vld [vmem:[#allocation5 + $0xb8] sm:$0xff]
        %v205 = vld [vmem:[#allocation5 + $0xc0] sm:$0xff]
        %v206 = vld [vmem:[#allocation5 + $0xc8] sm:$0xff]
        %v207 = vld [vmem:[#allocation5 + $0xd0] sm:$0xff]
        %v208 = vld [vmem:[#allocation5 + $0xd8] sm:$0xff]
        %v209 = vld [vmem:[#allocation5 + $0xe0] sm:$0xff]
        %v210 = vld [vmem:[#allocation5 + $0xe8] sm:$0xff]
        %v211 = vld [vmem:[#allocation5 + $0xf0] sm:$0xff]
        %v212 = vld [vmem:[#allocation5 + $0xf8] sm:$0xff]
        %vm213 = vcmask 523264
        %v215 = vsel %vm213, %v179, 0
        %v218 = vsel %vm213, %v180, 0
        %220 = vmatprep.subr.mxu0 %v182
        %221 = vmatpush1.msra.mxu0 %v181
        %222 = vmatprep.subr.mxu0 %v186
        %223 = vmatpush1.msra.mxu0 %v185
        %224 = vmatprep.subr.mxu0 %v190
        %225 = vmatpush1.msra.mxu0 %v189
        %226 = vmatprep.subr.mxu0 %v194
        %227 = vmatpush1.msra.mxu0 %v193
        %228 = vmatprep.subr.mxu0 %v198
        %229 = vmatpush1.msra.mxu0 %v197
        %230 = vmatprep.subr.mxu0 %v202
        %231 = vmatpush1.msra.mxu0 %v201
        %232 = vmatprep.subr.mxu0 %v206
        %233 = vmatpush1.msra.mxu0 %v205
        %234 = vmatprep.subr.mxu0 %v210
        %235 = vmatpush1.msra.mxu0 %v209
        %236 = vmatprep.subr.mxu0 0.0
        %237 = vmatpush1.msra.mxu0 0.0
        %238 = vmatprep.subr.mxu0 0.0
        %239 = vmatpush1.msra.mxu0 0.0
        %240 = vmatprep.subr.mxu0 0.0
        %241 = vmatpush1.msra.mxu0 0.0
        %242 = vmatprep.subr.mxu0 0.0
        %243 = vmatpush1.msra.mxu0 0.0
        %244 = vmatprep.subr.mxu0 0.0
        %245 = vmatpush1.msra.mxu0 0.0
        %246 = vmatprep.subr.mxu0 0.0
        %247 = vmatpush1.msra.mxu0 0.0
        %248 = vmatprep.subr.mxu0 0.0
        %249 = vmatpush1.msra.mxu0 0.0
        %250 = vmatprep.subr.mxu0 0.0
        %251 = vmatpush1.msra.mxu0 0.0
        %252 = vmatprep.subr.mxu0 0.0
        %253 = vmatpush1.msra.mxu0 0.0
        %254 = vmatprep.subr.mxu0 0.0
        %255 = vmatpush1.msra.mxu0 0.0
        %256 = vmatprep.subr.mxu0 0.0
        %257 = vmatpush1.msra.mxu0 0.0
        %258 = vmatprep.subr.mxu0 0.0
        %259 = vmatpush1.msra.mxu0 0.0
        %260 = vmatprep.subr.mxu0 0.0
        %261 = vmatpush1.msra.mxu0 0.0
        %262 = vmatprep.subr.mxu0 0.0
        %263 = vmatpush1.msra.mxu0 0.0
        %264 = vmatprep.subr.mxu0 0.0
        %265 = vmatpush1.msra.mxu0 0.0
        %266 = vmatprep.subr.mxu0 0.0
        %267 = vmatpush1.msra.mxu0 0.0
        %268 = vmatprep.subr.mxu0 0.0
        %269 = vmatpush1.msra.mxu0 0.0
        %270 = vmatprep.subr.mxu0 0.0
        %271 = vmatpush1.msra.mxu0 0.0
        %272 = vmatprep.subr.mxu0 0.0
        %273 = vmatpush1.msra.mxu0 0.0
        %274 = vmatprep.subr.mxu0 0.0
        %275 = vmatpush1.msra.mxu0 0.0
        %276 = vmatprep.subr.mxu0 0.0
        %277 = vmatpush1.msra.mxu0 0.0
        %278 = vmatprep.subr.mxu0 0.0
        %279 = vmatpush1.msra.mxu0 0.0
        %280 = vmatprep.subr.mxu0 0.0
        %281 = vmatpush1.msra.mxu0 0.0
        %282 = vmatprep.subr.mxu0 0.0
        %283 = vmatpush1.msra.mxu0 0.0
        %284 = vmatprep.mubr.f32.mxu0 0.0
        %285 = vmatmul.mubr.f32.gmra.mrb[0].mxu0 %v215
        %v286 = vpop.f32.mrb[0].mxu0
        %v287 = vadd.f32 0.0, %v286
        %v288 = vpop.f32.mrb[0].mxu0
        %v289 = vadd.f32 0.0, %v288
        %290 = vmatprep.mubr.f32.mxu0 0.0
        %291 = vmatmul.mubr.f32.gmra.mrb[0].mxu0 %v218
        %v292 = vpop.f32.mrb[0].mxu0
        %v293 = vadd.f32 0.0, %v292
        %v294 = vpop.f32.mrb[0].mxu0
        %v295 = vadd.f32 0.0, %v294
        %296 = vdwg.mxu0
        %297 = vmatprep.subr.mxu0 %v184
        %298 = vmatpush1.msra.mxu0 %v183
        %299 = vmatprep.subr.mxu0 %v188
        %300 = vmatpush1.msra.mxu0 %v187
        %301 = vmatprep.subr.mxu0 %v192
        %302 = vmatpush1.msra.mxu0 %v191
        %303 = vmatprep.subr.mxu0 %v196
        %304 = vmatpush1.msra.mxu0 %v195
        %305 = vmatprep.subr.mxu0 %v200
        %306 = vmatpush1.msra.mxu0 %v199
        %307 = vmatprep.subr.mxu0 %v204
        %308 = vmatpush1.msra.mxu0 %v203
        %309 = vmatprep.subr.mxu0 %v208
        %310 = vmatpush1.msra.mxu0 %v207
        %311 = vmatprep.subr.mxu0 %v212
        %312 = vmatpush1.msra.mxu0 %v211
        %313 = vmatprep.subr.mxu0 0.0
        %314 = vmatpush1.msra.mxu0 0.0
        %315 = vmatprep.subr.mxu0 0.0
        %316 = vmatpush1.msra.mxu0 0.0
        %317 = vmatprep.subr.mxu0 0.0
        %318 = vmatpush1.msra.mxu0 0.0
        %319 = vmatprep.subr.mxu0 0.0
        %320 = vmatpush1.msra.mxu0 0.0
        %321 = vmatprep.subr.mxu0 0.0
        %322 = vmatpush1.msra.mxu0 0.0
        %323 = vmatprep.subr.mxu0 0.0
        %324 = vmatpush1.msra.mxu0 0.0
        %325 = vmatprep.subr.mxu0 0.0
        %326 = vmatpush1.msra.mxu0 0.0
        %327 = vmatprep.subr.mxu0 0.0
        %328 = vmatpush1.msra.mxu0 0.0
        %329 = vmatprep.subr.mxu0 0.0
        %330 = vmatpush1.msra.mxu0 0.0
        %331 = vmatprep.subr.mxu0 0.0
        %332 = vmatpush1.msra.mxu0 0.0
        %333 = vmatprep.subr.mxu0 0.0
        %334 = vmatpush1.msra.mxu0 0.0
        %335 = vmatprep.subr.mxu0 0.0
        %336 = vmatpush1.msra.mxu0 0.0
        %337 = vmatprep.subr.mxu0 0.0
        %338 = vmatpush1.msra.mxu0 0.0
        %339 = vmatprep.subr.mxu0 0.0
        %340 = vmatpush1.msra.mxu0 0.0
        %341 = vmatprep.subr.mxu0 0.0
        %342 = vmatpush1.msra.mxu0 0.0
        %343 = vmatprep.subr.mxu0 0.0
        %344 = vmatpush1.msra.mxu0 0.0
        %345 = vmatprep.subr.mxu0 0.0
        %346 = vmatpush1.msra.mxu0 0.0
        %347 = vmatprep.subr.mxu0 0.0
        %348 = vmatpush1.msra.mxu0 0.0
        %349 = vmatprep.subr.mxu0 0.0
        %350 = vmatpush1.msra.mxu0 0.0
        %351 = vmatprep.subr.mxu0 0.0
        %352 = vmatpush1.msra.mxu0 0.0
        %353 = vmatprep.subr.mxu0 0.0
        %354 = vmatpush1.msra.mxu0 0.0
        %355 = vmatprep.subr.mxu0 0.0
        %356 = vmatpush1.msra.mxu0 0.0
        %357 = vmatprep.subr.mxu0 0.0
        %358 = vmatpush1.msra.mxu0 0.0
        %359 = vmatprep.subr.mxu0 0.0
        %360 = vmatpush1.msra.mxu0 0.0
        %361 = vmatprep.mubr.f32.mxu0 0.0
        %362 = vmatmul.mubr.f32.gmra.mrb[0].mxu0 %v215
        %v363 = vpop.f32.mrb[0].mxu0
        %v364 = vadd.f32 0.0, %v363
        %v365 = vpop.f32.mrb[0].mxu0
        %v366 = vadd.f32 0.0, %v365
        %367 = vmatprep.mubr.f32.mxu0 0.0
        %368 = vmatmul.mubr.f32.gmra.mrb[0].mxu0 %v218
        %v369 = vpop.f32.mrb[0].mxu0
        %v370 = vadd.f32 0.0, %v369
        %v371 = vpop.f32.mrb[0].mxu0
        %v372 = vadd.f32 0.0, %v371
        %373 = vdwg.mxu0
        %v374 = vmul.f32 %v287, 0.1
        %v375 = vmul.f32 %v289, 0.1
        %v376 = vmul.f32 %v364, 0.1
        %v377 = vmul.f32 %v366, 0.1
        %v378 = vmul.f32 %v293, 0.1
        %v379 = vmul.f32 %v295, 0.1
        %v380 = vmul.f32 %v370, 0.1
        %v381 = vmul.f32 %v372, 0.1
        %v382 = vmax.f32 %v287, %v374
        %v383 = vmax.f32 %v289, %v375
        %v384 = vmax.f32 %v364, %v376
        %v385 = vmax.f32 %v366, %v377
        %v386 = vmax.f32 %v293, %v378
        %v387 = vmax.f32 %v295, %v379
        %v388 = vmax.f32 %v370, %v380
        %v389 = vmax.f32 %v372, %v381
        %390 = vst [vmem:[%s176] sm:$0xff] %v382
        %391 = vst [vmem:[%s176 + $0x8] sm:$0xff] %v383
        %392 = vst [vmem:[%s176 + $0x10] sm:$0xff] %v384
        %393 = vst [vmem:[%s176 + $0x18] sm:$0xff] %v385
        %394 = vst [vmem:[%s176 + $0x20] sm:$0xff] %v386
        %395 = vst [vmem:[%s176 + $0x28] sm:$0xff] %v387
        %396 = vst [vmem:[%s176 + $0x30] sm:$0xff] %v388
        %397 = vst [vmem:[%s176 + $0x38] sm:$0xff] %v389
        %s398 = sand.u32 %s75, 1
        %s399 = scalar_lea.sflag [#allocation4], %s398
        %s400 = sand.u32 %s75, 1
        %s401 = smul.addr %s400, 64
        %s402 = scalar_lea.vmem [#allocation7], %s401
        // Predicated region
        $region37: #{tpu_custom_call.1} parent=27 // pred_check
          %p403 = pneg %p85
        $region38: #{tpu_custom_call.1} parent=27 // pred_check_branch
          %405 = sbr.rel (%p403) target = $region40
        $region39: #{tpu_custom_call.1} parent=27 // pred_region
          %s406 = smul.u32 2, %s20
          %s408 = ssub.s32 1024, 1024
          %409 = vsyncadd %s399, %s408
          %s410 = smul.addr %s406, 4
          %s411 = smul.addr %s410, 128
          %s412 = scalar_lea.hbm %s2, %s411
          %s413 = sshll.u32 %s402, 4
          %s414 = int_to_ptr.vmem [resolvable:$true] %s413
          %419 = dma.vmem_to_hbm [thread:$0]  %s414, 1024, %s412, %s399, 512, 512, 32
        $region40: #{tpu_custom_call.1} parent=27 // pred_fallthru
          _
      $region28: #{tpu_custom_call.1} parent=5 // pred_fallthru
        _
      %p420 = scmp.le.s32.totalorder 2, %s15
      // Predicated region
      $region41: #{tpu_custom_call.1} parent=5 // pred_check
        %p421 = pneg %p420
      $region42: #{tpu_custom_call.1} parent=5 // pred_check_branch
        %423 = sbr.rel (%p421) target = $region44
      $region43: #{tpu_custom_call.1} parent=5 // pred_region
        %s424 = ssub.s32 %s15, 2
        // Predicated region
        $region45: #{tpu_custom_call.1} parent=43 // pred_check
          %p425 = pneg %p91
        $region46: #{tpu_custom_call.1} parent=43 // pred_check_branch
          %427 = sbr.rel (%p425) target = $region48
        $region47: #{tpu_custom_call.1} parent=43 // pred_region
          %s428 = sand.u32 %s76, 1
          %s429 = scalar_lea.sflag [#allocation4], %s428
          %s430 = sand.u32 %s76, 1
          %s431 = smul.addr %s430, 64
          %s432 = scalar_lea.vmem [#allocation7], %s431
          %433 = dma.done %s429, 1024
        $region48: #{tpu_custom_call.1} parent=43 // pred_fallthru
          _
      $region44: #{tpu_custom_call.1} parent=5 // pred_fallthru
        _
    $region6: #{tpu_custom_call.1} parent=1 // loop_footer
      %s19 = sadd.s32 1, %s15
    $region7: #{tpu_custom_call.1} parent=1 // loop_footer_branch
      %14 = sbr.rel target = $region3
    $region8: #{tpu_custom_call.1} parent=1 // loop_exit
      _
    %434 = vsyncpa [#allocation3], 1
    %s435 = scalar_lea.sflag [#allocation3], 1
    %436 = vsyncpa %s435, 1
    %437 = vsyncpa [#allocation6], 1
    %438 = vsyncpa [#allocation4], 1
    %s439 = scalar_lea.sflag [#allocation4], 1
    %440 = vsyncpa %s439, 1

</llo_original>
